<compile_context>
chip_gen: v6e
topology: v6e:2x2x1
jax: 0.10.0
libtpu: 0.0.40
codegen_flags: <defaults>
</compile_context>

<pallas_src>
import functools

import jax
import jax.numpy as jnp
from jax.experimental import pallas as pl
from jax.experimental.pallas import tpu as pltpu


# ---------------------------------------------------------------------------
# Kernels
# ---------------------------------------------------------------------------
def mlp3_fused_kernel(x_ref, w1_ref, b1_ref, w2_ref, b2_ref, w3_ref, b3_ref, o_ref):
    """All weights VMEM-resident; one batch tile per grid step."""
    h1 = jnp.dot(x_ref[...].astype(w1_ref.dtype), w1_ref[...],
                 preferred_element_type=jnp.float32)
    h1 = jnp.maximum(h1 + b1_ref[...], 0.0)
    h2 = jnp.dot(h1.astype(w2_ref.dtype), w2_ref[...],
                 preferred_element_type=jnp.float32)
    h2 = jnp.maximum(h2 + b2_ref[...], 0.0)
    h3 = jnp.dot(h2.astype(w3_ref.dtype), w3_ref[...],
                 preferred_element_type=jnp.float32)
    o_ref[...] = (h3 + b3_ref[...]).astype(o_ref.dtype)


def mlp3_ksplit_kernel(x_ref, w1_ref, b1_ref, w2_ref, b2_ref, w3_ref, b3_ref,
                       o_ref, acc_ref):
    """Layer-1 K reduction streamed over grid axis 1 (w1 too big to keep resident)."""
    k = pl.program_id(1)

    @pl.when(k == 0)
    def _():
        acc_ref[...] = jnp.zeros_like(acc_ref)

    acc_ref[...] += jnp.dot(x_ref[...].astype(w1_ref.dtype), w1_ref[...],
                            preferred_element_type=jnp.float32)

    @pl.when(k == pl.num_programs(1) - 1)
    def _():
        h1 = jnp.maximum(acc_ref[...] + b1_ref[...], 0.0)
        h2 = jnp.dot(h1.astype(w2_ref.dtype), w2_ref[...],
                     preferred_element_type=jnp.float32)
        h2 = jnp.maximum(h2 + b2_ref[...], 0.0)
        h3 = jnp.dot(h2.astype(w3_ref.dtype), w3_ref[...],
                     preferred_element_type=jnp.float32)
        o_ref[...] = (h3 + b3_ref[...]).astype(o_ref.dtype)


# ---------------------------------------------------------------------------
# Helpers
# ---------------------------------------------------------------------------
def _round_up(n, m):
    return ((n + m - 1) // m) * m


def _pad2d(a, rows, cols):
    r, c = a.shape
    if (r, c) == (rows, cols):
        return a
    return jnp.pad(a, ((0, rows - r), (0, cols - c)))


def _device_kind():
    try:
        return jax.devices()[0].device_kind.lower()
    except Exception:
        return ""


def _mxu_align():
    kind = _device_kind()
    # v6e / v7x MXU tiles are 256x256; v4 / v5e are 128x128.
    return 256 if ("v6" in kind or "v7" in kind or "7x" in kind) else 128


def _vmem_cap_bytes():
    kind = _device_kind()
    # v7x has 64 MiB VMEM per TensorCore; v5e/v6e have 128 MiB.
    return (56 << 20) if ("v7" in kind or "7x" in kind) else (100 << 20)


# ---------------------------------------------------------------------------
# One-time parameter preparation (pad + cast once, NOT per forward)
# ---------------------------------------------------------------------------
def prepare_params(params, *, compute_dtype=jnp.bfloat16):
    """Pad weights to MXU-friendly shapes and cast matmul operands (bf16 default).

    Accumulation, bias add and ReLU stay float32 inside the kernel; only the dot
    operands use `compute_dtype`.
    """
    w1, b1, w2, b2, w3, b3 = (params["w1"], params["b1"], params["w2"],
                              params["b2"], params["w3"], params["b3"])
    in_dim, hidden, out_dim = w1.shape[0], w2.shape[1], w3.shape[1]

    align = _mxu_align()
    F_pad = _round_up(in_dim, 128) if in_dim <= 128 else _round_up(in_dim, align)
    H_pad = _round_up(hidden, 128)
    O_pad = _round_up(out_dim, 128)

    wd = compute_dtype
    return {
        "w1": _pad2d(w1, F_pad, F_pad).astype(wd),
        "b1": _pad2d(b1, 1, F_pad).astype(jnp.float32),
        "w2": _pad2d(w2, F_pad, H_pad).astype(wd),
        "b2": _pad2d(b2, 1, H_pad).astype(jnp.float32),
        "w3": _pad2d(w3, H_pad, O_pad).astype(wd),
        "b3": _pad2d(b3, 1, O_pad).astype(jnp.float32),
        "in_dim": int(in_dim),
        "out_dim": int(out_dim),
    }


# ---------------------------------------------------------------------------
# Forward pass
# ---------------------------------------------------------------------------
@functools.partial(jax.jit, static_argnames=("out_dim", "tb", "k_tile"))
def _mlp3_forward(x, w1, b1, w2, b2, w3, b3, *, out_dim, tb, k_tile):
    B, _ = x.shape
    F_pad = w1.shape[0]
    H_pad = w2.shape[1]
    O_pad = w3.shape[1]
    w_itemsize = w1.dtype.itemsize

    # Batch tile: multiple of 8 sublanes, no larger than the (padded) batch.
    tb = max(8, (min(int(tb), _round_up(B, 8)) // 8) * 8)
    B_pad = _round_up(B, tb)
    # TODO(synk): on v7x also force B_pad // tb to be even so the "parallel" batch
    # axis balances both TensorCores.

    x_p = _pad2d(x, B_pad, F_pad)            # x stays f32; cast to w dtype in-kernel

    vmem_cap = _vmem_cap_bytes()
    w1_bytes = F_pad * F_pad * w_itemsize
    if k_tile is None and w1_bytes > vmem_cap // 2:
        # Auto: stream w1 in K tiles once it would eat more than half the budget.
        for cand in (2048, 1024, 512, 256, 128):
            if F_pad % cand == 0 and 2 * cand * F_pad * w_itemsize <= vmem_cap // 2:
                k_tile = cand
                break
        else:
            k_tile = 128
    if k_tile is not None and (k_tile <= 0 or F_pad % k_tile != 0 or k_tile >= F_pad):
        k_tile = None                         # degenerate split -> fused path

    # Constant weight / bias blocks: same block every grid step -> VMEM-resident,
    # single-buffered (double-buffering constants is pure VMEM waste).
    def const2(shape):
        return pl.BlockSpec(shape, lambda i: (0, 0), pipeline_mode=pl.Buffered(1))

    def const3(shape):
        return pl.BlockSpec(shape, lambda i, k: (0, 0), pipeline_mode=pl.Buffered(1))

    flops = 2 * B_pad * (F_pad * F_pad + F_pad * H_pad + H_pad * O_pad)
    bytes_accessed = (x_p.size * x_p.dtype.itemsize
                      + sum(a.size * a.dtype.itemsize for a in (w1, b1, w2, b2, w3, b3))
                      + B_pad * O_pad * x.dtype.itemsize)
    cost = pl.CostEstimate(flops=int(flops), transcendentals=0,
                           bytes_accessed=int(bytes_accessed))

    if k_tile is None:
        resident = (w1_bytes + F_pad * H_pad * w_itemsize + H_pad * O_pad * w_itemsize
                    + 4 * (F_pad + H_pad + O_pad))
        streaming = 2 * tb * (F_pad + O_pad) * 4          # x / out tiles (double-buffered)
        interm = tb * (F_pad + H_pad + O_pad) * 4          # h1/h2/h3 temporaries
        need = resident + streaming + interm
        vmem_limit = int(min(vmem_cap, max(int(need * 1.5) + (2 << 20), 32 << 20)))

        out = pl.pallas_call(
            mlp3_fused_kernel,
            out_shape=jax.ShapeDtypeStruct((B_pad, O_pad), x.dtype),
            grid=(B_pad // tb,),
            in_specs=[
                pl.BlockSpec((tb, F_pad), lambda i: (i, 0)),   # x: batch-tiled
                const2((F_pad, F_pad)), const2((1, F_pad)),    # w1, b1
                const2((F_pad, H_pad)), const2((1, H_pad)),    # w2, b2
                const2((H_pad, O_pad)), const2((1, O_pad)),    # w3, b3
            ],
            out_specs=pl.BlockSpec((tb, O_pad), lambda i: (i, 0)),
            compiler_params=pltpu.CompilerParams(
                dimension_semantics=("parallel",),             # megacore batch split
                vmem_limit_bytes=vmem_limit,
            ),
            cost_estimate=cost,
        )(x_p, w1, b1, w2, b2, w3, b3)
    else:
        n_k = F_pad // k_tile
        resident = (F_pad * H_pad * w_itemsize + H_pad * O_pad * w_itemsize
                    + 4 * (F_pad + H_pad + O_pad))
        streaming = (2 * k_tile * F_pad * w_itemsize        # streamed w1 K tiles
                     + 2 * tb * k_tile * 4                  # x tiles
                     + 2 * tb * O_pad * 4)                   # out tiles
        interm = tb * (F_pad + H_pad + O_pad) * 4 + tb * F_pad * 4   # temps + acc scratch
        need = resident + streaming + interm
        vmem_limit = int(min(vmem_cap, max(int(need * 1.5) + (2 << 20), 32 << 20)))

        out = pl.pallas_call(
            mlp3_ksplit_kernel,
            out_shape=jax.ShapeDtypeStruct((B_pad, O_pad), x.dtype),
            grid=(B_pad // tb, n_k),
            in_specs=[
                pl.BlockSpec((tb, k_tile), lambda i, k: (i, k)),     # x: batch + K tiled
                pl.BlockSpec((k_tile, F_pad), lambda i, k: (k, 0)),  # w1: streamed K tiles
                const3((1, F_pad)),                                  # b1
                const3((F_pad, H_pad)), const3((1, H_pad)),          # w2, b2
                const3((H_pad, O_pad)), const3((1, O_pad)),          # w3, b3
            ],
            out_specs=pl.BlockSpec((tb, O_pad), lambda i, k: (i, 0)),
            scratch_shapes=[pltpu.VMEM((tb, F_pad), jnp.float32)],   # layer-1 accumulator
            compiler_params=pltpu.CompilerParams(
                dimension_semantics=("parallel", "arbitrary"),
                vmem_limit_bytes=vmem_limit,
            ),
            cost_estimate=cost,
        )(x_p, w1, b1, w2, b2, w3, b3)

    return out[:B, :out_dim]


def linear_regression_3layer(x, prepared, *, tb=256, k_tile=None):
    """Forward pass. `prepared` comes from prepare_params(); tb = batch tile rows."""
    return _mlp3_forward(x, prepared["w1"], prepared["b1"], prepared["w2"],
                         prepared["b2"], prepared["w3"], prepared["b3"],
                         out_dim=prepared["out_dim"], tb=tb, k_tile=k_tile)


# ---------------------------------------------------------------------------
# Parameter init (mimics nn.Linear default: uniform +-1/sqrt(fan_in))
# ---------------------------------------------------------------------------
def init_params(key, in_features_dim, out_features_dim, hidden=256):
    """Weights stored transposed ([fan_in, fan_out]) relative to PyTorch."""
    ks = jax.random.split(key, 6)

    def lin(kw, kb, fan_in, fan_out):
        bound = 1.0 / jnp.sqrt(fan_in)
        w = jax.random.uniform(kw, (fan_in, fan_out), jnp.float32, -bound, bound)
        b = jax.random.uniform(kb, (1, fan_out), jnp.float32, -bound, bound)
        return w, b

    w1, b1 = lin(ks[0], ks[1], in_features_dim, in_features_dim)
    w2, b2 = lin(ks[2], ks[3], in_features_dim, hidden)
    w3, b3 = lin(ks[4], ks[5], hidden, out_features_dim)
    return {"w1": w1, "b1": b1, "w2": w2, "b2": b2, "w3": w3, "b3": b3}


if __name__ == "__main__":
    key = jax.random.PRNGKey(0)
    in_features_dim, out_features_dim = 32, 16
    batch = 8

    kx, kp = jax.random.split(key)
    x = jax.random.normal(kx, (batch, in_features_dim), jnp.float32)
    params = init_params(kp, in_features_dim, out_features_dim)

    def ref(xv, p):
        hp = jax.lax.Precision.HIGHEST
        h = jnp.maximum(jnp.dot(xv, p["w1"], precision=hp) + p["b1"], 0.0)
        h = jnp.maximum(jnp.dot(h, p["w2"], precision=hp) + p["b2"], 0.0)
        return jnp.dot(h, p["w3"], precision=hp) + p["b3"]

    # --- Test 1: default bf16 matmul operands, fused (weights-resident) kernel ---
    prepared = prepare_params(params)                       # bf16 operands by default
    out = jax.block_until_ready(linear_regression_3layer(x, prepared))
    expected = ref(x, params)
    assert out.shape == (batch, out_features_dim)
    assert jnp.allclose(out, expected, atol=3e-2, rtol=3e-2), "bf16 fused path mismatch"

    # --- Test 2: forced layer-1 K-split path, f32 operands, tighter tolerance ---
    in2 = 384
    x2 = jax.random.normal(jax.random.PRNGKey(1), (batch, in2), jnp.float32)
    params2 = init_params(jax.random.PRNGKey(2), in2, out_features_dim)
    prepared2 = prepare_params(params2, compute_dtype=jnp.float32)
    out2 = jax.block_until_ready(
        linear_regression_3layer(x2, prepared2, k_tile=128))
    expected2 = ref(x2, params2)
    assert out2.shape == (batch, out_features_dim)
    assert jnp.allclose(out2, expected2, atol=1e-2, rtol=1e-2), "K-split path mismatch"

    print("KERNEL_OK")
</pallas_src>

<mosaic_0001>
module attributes {stable_mosaic.version = 11 : i64} {
  func.func @mlp3_fused_kernel(%arg0: i32, %arg1: memref<8x128xf32, #tpu.memory_space<vmem>>, %arg2: memref<128x128xbf16, #tpu.memory_space<vmem>>, %arg3: memref<1x128xf32, #tpu.memory_space<vmem>>, %arg4: memref<128x256xbf16, #tpu.memory_space<vmem>>, %arg5: memref<1x256xf32, #tpu.memory_space<vmem>>, %arg6: memref<256x128xbf16, #tpu.memory_space<vmem>>, %arg7: memref<1x128xf32, #tpu.memory_space<vmem>>, %arg8: memref<8x128xf32, #tpu.memory_space<vmem>>) attributes {dimension_semantics = [#tpu.dimension_semantics<parallel>], iteration_bounds = array<i64: 1>, scalar_prefetch = 0 : i64, scratch_operands = 0 : i64, tpu.core_type = #tpu.core_type<tc>, window_params = [{transform_indices = @transform_0, window_bounds = array<i64: 8, 128>}, {pipeline_mode = #tpu.pipeline_mode<synchronous>, transform_indices = @transform_1, window_bounds = array<i64: 128, 128>}, {pipeline_mode = #tpu.pipeline_mode<synchronous>, transform_indices = @transform_2, window_bounds = array<i64: 1, 128>}, {pipeline_mode = #tpu.pipeline_mode<synchronous>, transform_indices = @transform_3, window_bounds = array<i64: 128, 256>}, {pipeline_mode = #tpu.pipeline_mode<synchronous>, transform_indices = @transform_4, window_bounds = array<i64: 1, 256>}, {pipeline_mode = #tpu.pipeline_mode<synchronous>, transform_indices = @transform_5, window_bounds = array<i64: 256, 128>}, {pipeline_mode = #tpu.pipeline_mode<synchronous>, transform_indices = @transform_6, window_bounds = array<i64: 1, 128>}, {transform_indices = @transform_7, window_bounds = array<i64: 8, 128>}]} {
    %c0 = arith.constant 0 : index
    %c0_0 = arith.constant 0 : index
    %0 = vector.load %arg1[%c0, %c0_0] : memref<8x128xf32, #tpu.memory_space<vmem>>, vector<8x128xf32>
    %1 = arith.truncf %0 : vector<8x128xf32> to vector<8x128xbf16>
    %c0_1 = arith.constant 0 : index
    %c0_2 = arith.constant 0 : index
    %2 = vector.load %arg2[%c0_1, %c0_2] : memref<128x128xbf16, #tpu.memory_space<vmem>>, vector<128x128xbf16>
    %cst = arith.constant dense<0.000000e+00> : vector<8x128xf32>
    %3 = tpu.matmul %1, %2, %cst {dimension_numbers = #tpu.dot_dimension_numbers<[1], [0], [0], [1], [0, 0, 1, 1], [], []>} : vector<8x128xbf16>, vector<128x128xbf16>, vector<8x128xf32> -> vector<8x128xf32>
    %c0_3 = arith.constant 0 : index
    %c0_4 = arith.constant 0 : index
    %4 = vector.load %arg3[%c0_3, %c0_4] : memref<1x128xf32, #tpu.memory_space<vmem>>, vector<1x128xf32>
    %5 = vector.broadcast %4 : vector<1x128xf32> to vector<8x128xf32>
    %6 = arith.addf %3, %5 : vector<8x128xf32>
    %cst_5 = arith.constant 0.000000e+00 : f32
    %7 = vector.broadcast %cst_5 : f32 to vector<8x128xf32>
    %8 = arith.maximumf %6, %7 : vector<8x128xf32>
    %9 = arith.truncf %8 : vector<8x128xf32> to vector<8x128xbf16>
    %c0_6 = arith.constant 0 : index
    %c0_7 = arith.constant 0 : index
    %10 = vector.load %arg4[%c0_6, %c0_7] : memref<128x256xbf16, #tpu.memory_space<vmem>>, vector<128x256xbf16>
    %cst_8 = arith.constant dense<0.000000e+00> : vector<8x256xf32>
    %11 = tpu.matmul %9, %10, %cst_8 {dimension_numbers = #tpu.dot_dimension_numbers<[1], [0], [0], [1], [0, 0, 1, 1], [], []>} : vector<8x128xbf16>, vector<128x256xbf16>, vector<8x256xf32> -> vector<8x256xf32>
    %c0_9 = arith.constant 0 : index
    %c0_10 = arith.constant 0 : index
    %12 = vector.load %arg5[%c0_9, %c0_10] : memref<1x256xf32, #tpu.memory_space<vmem>>, vector<1x256xf32>
    %13 = vector.broadcast %12 : vector<1x256xf32> to vector<8x256xf32>
    %14 = arith.addf %11, %13 : vector<8x256xf32>
    %cst_11 = arith.constant 0.000000e+00 : f32
    %15 = vector.broadcast %cst_11 : f32 to vector<8x256xf32>
    %16 = arith.maximumf %14, %15 : vector<8x256xf32>
    %17 = arith.truncf %16 : vector<8x256xf32> to vector<8x256xbf16>
    %c0_12 = arith.constant 0 : index
    %c0_13 = arith.constant 0 : index
    %18 = vector.load %arg6[%c0_12, %c0_13] : memref<256x128xbf16, #tpu.memory_space<vmem>>, vector<256x128xbf16>
    %cst_14 = arith.constant dense<0.000000e+00> : vector<8x128xf32>
    %19 = tpu.matmul %17, %18, %cst_14 {dimension_numbers = #tpu.dot_dimension_numbers<[1], [0], [0], [1], [0, 0, 1, 1], [], []>} : vector<8x256xbf16>, vector<256x128xbf16>, vector<8x128xf32> -> vector<8x128xf32>
    %c0_15 = arith.constant 0 : index
    %c0_16 = arith.constant 0 : index
    %20 = vector.load %arg7[%c0_15, %c0_16] : memref<1x128xf32, #tpu.memory_space<vmem>>, vector<1x128xf32>
    %21 = vector.broadcast %20 : vector<1x128xf32> to vector<8x128xf32>
    %22 = arith.addf %19, %21 : vector<8x128xf32>
    %c0_17 = arith.constant 0 : index
    %c0_18 = arith.constant 0 : index
    %23 = vector.load %arg8[%c0_17, %c0_18] : memref<8x128xf32, #tpu.memory_space<vmem>>, vector<8x128xf32>
    tpu.vector_store %arg8[%c0_17, %c0_18], %22 {strides = array<i32>} : memref<8x128xf32, #tpu.memory_space<vmem>>, vector<8x128xf32>,
    return
  }
  func.func @transform_0(%arg0: i32) -> (i32, i32) {
    %c0_i32 = arith.constant 0 : i32
    %c0_i32_0 = arith.constant 0 : i32
    return %arg0, %c0_i32 : i32, i32
  }
  func.func @transform_1(%arg0: i32) -> (i32, i32) {
    %c0_i32 = arith.constant 0 : i32
    %c0_i32_0 = arith.constant 0 : i32
    %c0_i32_1 = arith.constant 0 : i32
    return %c0_i32, %c0_i32_0 : i32, i32
  }
  func.func @transform_2(%arg0: i32) -> (i32, i32) {
    %c0_i32 = arith.constant 0 : i32
    %c0_i32_0 = arith.constant 0 : i32
    %c0_i32_1 = arith.constant 0 : i32
    return %c0_i32, %c0_i32_0 : i32, i32
  }
  func.func @transform_3(%arg0: i32) -> (i32, i32) {
    %c0_i32 = arith.constant 0 : i32
    %c0_i32_0 = arith.constant 0 : i32
    %c0_i32_1 = arith.constant 0 : i32
    return %c0_i32, %c0_i32_0 : i32, i32
  }
  func.func @transform_4(%arg0: i32) -> (i32, i32) {
    %c0_i32 = arith.constant 0 : i32
    %c0_i32_0 = arith.constant 0 : i32
    %c0_i32_1 = arith.constant 0 : i32
    return %c0_i32, %c0_i32_0 : i32, i32
  }
  func.func @transform_5(%arg0: i32) -> (i32, i32) {
    %c0_i32 = arith.constant 0 : i32
    %c0_i32_0 = arith.constant 0 : i32
    %c0_i32_1 = arith.constant 0 : i32
    return %c0_i32, %c0_i32_0 : i32, i32
  }
  func.func @transform_6(%arg0: i32) -> (i32, i32) {
    %c0_i32 = arith.constant 0 : i32
    %c0_i32_0 = arith.constant 0 : i32
    %c0_i32_1 = arith.constant 0 : i32
    return %c0_i32, %c0_i32_0 : i32, i32
  }
  func.func @transform_7(%arg0: i32) -> (i32, i32) {
    %c0_i32 = arith.constant 0 : i32
    %c0_i32_0 = arith.constant 0 : i32
    return %arg0, %c0_i32 : i32, i32
  }
}

</mosaic_0001>

<llo_original>
// kernel: _mlp3_forward.1
$region0: #{_mlp3_forward.1}
  #allocation0 [shape = 'u32[]', space=smem, size = 0x4, offset = 0x4, fixed_abs, tag = 'smem constant byte address 0x4 - core index']
  #allocation1 [shape = 'u32[144,128]{1,0:T(1,128)}', space=vmem, size = 0x12000, scoped, tag = 'internal scratch']
  %s0 = inlined_call_operand.vmem [shape: f32[8,128], index: 0, kind: input, shape index: {}]
  %s1 = inlined_call_operand.hbm [shape: bf16[128,128], index: 1, kind: input, shape index: {}]
  %s2 = inlined_call_operand.vmem [shape: f32[1,128], index: 2, kind: input, shape index: {}]
  %s3 = inlined_call_operand.hbm [shape: bf16[128,256], index: 3, kind: input, shape index: {}]
  %s4 = inlined_call_operand.vmem [shape: f32[1,256], index: 4, kind: input, shape index: {}]
  %s5 = inlined_call_operand.hbm [shape: bf16[256,128], index: 5, kind: input, shape index: {}]
  %s6 = inlined_call_operand.vmem [shape: f32[1,128], index: 6, kind: input, shape index: {}]
  %s7 = inlined_call_operand.hbm [shape: f32[8,128], index: 7, kind: output, shape index: {}]
  %s8 = sld [smem:[#allocation0]]
  $region50: #{_mlp3_forward.1} parent=0
    _
  %s10 = ssub.s32 1, %s8
  %s11 = scalar_select 0, %s10, %s8
  $region1: #{_mlp3_forward.1} parent=0
    #allocation2 [shape = 'u8[32768]{0}', space=vmem, size = 0x8000, scoped, tag = 'input window, operand 1, single buffered']
    #allocation3 [shape = 's32[1]{0}', space=sflag, size = 0x4, scoped, tag = 'scoped memory for _mlp3_forward.1']
    #allocation4 [shape = 's32[1]{0}', space=sflag, size = 0x4, scoped, tag = 'scoped memory for _mlp3_forward.1']
    #allocation5 [shape = 'u8[65536]{0}', space=vmem, size = 0x10000, scoped, tag = 'input window, operand 3, single buffered']
    #allocation6 [shape = 's32[1]{0}', space=sflag, size = 0x4, scoped, tag = 'scoped memory for _mlp3_forward.1']
    #allocation7 [shape = 'u8[65536]{0}', space=vmem, size = 0x10000, scoped, tag = 'input window, operand 5, single buffered']
    #allocation8 [shape = 'u8[4096]{0}', space=vmem, size = 0x1000, scoped, tag = 'output window, operand 0, single buffered']
    %12 = vsyncpa [#allocation3], 0
    %13 = vsyncpa [#allocation6], 0
    %14 = vsyncpa [#allocation4], 0
    // Predicated region
    $region2: #{_mlp3_forward.1} parent=1 // pred_check
      _
    $region3: #{_mlp3_forward.1} parent=1 // pred_check_branch
      %16 = sbr.rel (0) target = $region5
    $region4: #{_mlp3_forward.1} parent=1 // pred_region
      _
    $region5: #{_mlp3_forward.1} parent=1 // pred_fallthru
      _
    // Predicated region
    $region6: #{_mlp3_forward.1} parent=1 // pred_check
      _
    $region7: #{_mlp3_forward.1} parent=1 // pred_check_branch
      %18 = sbr.rel (0) target = $region9
    $region8: #{_mlp3_forward.1} parent=1 // pred_region
      %s20 = ssub.s32 1024, 1024
      %21 = vsyncadd [#allocation3], %s20
      %s22 = sshll.u32 [#allocation2], 4
      %s23 = int_to_ptr.vmem [resolvable:$true] %s22
      %28 = dma.hbm_to_vmem [thread:$0]  %s1, 1024, %s23, [#allocation3], 64, 64, 4
    $region9: #{_mlp3_forward.1} parent=1 // pred_fallthru
      _
    // Predicated region
    $region10: #{_mlp3_forward.1} parent=1 // pred_check
      _
    $region11: #{_mlp3_forward.1} parent=1 // pred_check_branch
      %30 = sbr.rel (0) target = $region13
    $region12: #{_mlp3_forward.1} parent=1 // pred_region
      _
    $region13: #{_mlp3_forward.1} parent=1 // pred_fallthru
      _
    // Predicated region
    $region14: #{_mlp3_forward.1} parent=1 // pred_check
      _
    $region15: #{_mlp3_forward.1} parent=1 // pred_check_branch
      %32 = sbr.rel (0) target = $region17
    $region16: #{_mlp3_forward.1} parent=1 // pred_region
      %s34 = ssub.s32 2048, 2048
      %35 = vsyncadd [#allocation6], %s34
      %s36 = sshll.u32 [#allocation5], 4
      %s37 = int_to_ptr.vmem [resolvable:$true] %s36
      %42 = dma.hbm_to_vmem [thread:$0]  %s3, 2048, %s37, [#allocation6], 128, 128, 8
    $region17: #{_mlp3_forward.1} parent=1 // pred_fallthru
      _
    // Predicated region
    $region18: #{_mlp3_forward.1} parent=1 // pred_check
      _
    $region19: #{_mlp3_forward.1} parent=1 // pred_check_branch
      %44 = sbr.rel (0) target = $region21
    $region20: #{_mlp3_forward.1} parent=1 // pred_region
      _
    $region21: #{_mlp3_forward.1} parent=1 // pred_fallthru
      _
    // Predicated region
    $region22: #{_mlp3_forward.1} parent=1 // pred_check
      _
    $region23: #{_mlp3_forward.1} parent=1 // pred_check_branch
      %46 = sbr.rel (0) target = $region25
    $region24: #{_mlp3_forward.1} parent=1 // pred_region
      %s48 = ssub.s32 2048, 2048
      %49 = vsyncadd [#allocation6], %s48
      %s50 = sshll.u32 [#allocation7], 4
      %s51 = int_to_ptr.vmem [resolvable:$true] %s50
      %56 = dma.hbm_to_vmem [thread:$0]  %s5, 2048, %s51, [#allocation6], 64, 64, 4
    $region25: #{_mlp3_forward.1} parent=1 // pred_fallthru
      _
    // Predicated region
    $region26: #{_mlp3_forward.1} parent=1 // pred_check
      _
    $region27: #{_mlp3_forward.1} parent=1 // pred_check_branch
      %58 = sbr.rel (0) target = $region29
    $region28: #{_mlp3_forward.1} parent=1 // pred_region
      _
    $region29: #{_mlp3_forward.1} parent=1 // pred_fallthru
      _
    // Predicated region
    $region30: #{_mlp3_forward.1} parent=1 // pred_check
      _
    $region31: #{_mlp3_forward.1} parent=1 // pred_check_branch
      %60 = sbr.rel (0) target = $region33
    $region32: #{_mlp3_forward.1} parent=1 // pred_region
      %61 = dma.done [#allocation3], 1024
    $region33: #{_mlp3_forward.1} parent=1 // pred_fallthru
      _
    // Predicated region
    $region34: #{_mlp3_forward.1} parent=1 // pred_check
      _
    $region35: #{_mlp3_forward.1} parent=1 // pred_check_branch
      %63 = sbr.rel (0) target = $region37
    $region36: #{_mlp3_forward.1} parent=1 // pred_region
      %64 = dma.done [#allocation6], 2048
    $region37: #{_mlp3_forward.1} parent=1 // pred_fallthru
      _
    // Predicated region
    $region38: #{_mlp3_forward.1} parent=1 // pred_check
      _
    $region39: #{_mlp3_forward.1} parent=1 // pred_check_branch
      %66 = sbr.rel (0) target = $region41
    $region40: #{_mlp3_forward.1} parent=1 // pred_region
      %67 = dma.done [#allocation6], 2048
    $region41: #{_mlp3_forward.1} parent=1 // pred_fallthru
      _
    %v69 = vld [vmem:[%s0] sm:$0xff]
    %v70 = vpack.c.bf16 %v69, %v69
    %v71 = vld [vmem:[#allocation2] sm:$0xf]
    %v72 = vld [vmem:[#allocation2 + $0x4] sm:$0xf]
    %v73 = vld [vmem:[#allocation2 + $0x8] sm:$0xf]
    %v74 = vld [vmem:[#allocation2 + $0xc] sm:$0xf]
    %v75 = vld [vmem:[#allocation2 + $0x10] sm:$0xf]
    %v76 = vld [vmem:[#allocation2 + $0x14] sm:$0xf]
    %v77 = vld [vmem:[#allocation2 + $0x18] sm:$0xf]
    %v78 = vld [vmem:[#allocation2 + $0x1c] sm:$0xf]
    %v79 = vld [vmem:[#allocation2 + $0x20] sm:$0xf]
    %v80 = vld [vmem:[#allocation2 + $0x24] sm:$0xf]
    %v81 = vld [vmem:[#allocation2 + $0x28] sm:$0xf]
    %v82 = vld [vmem:[#allocation2 + $0x2c] sm:$0xf]
    %v83 = vld [vmem:[#allocation2 + $0x30] sm:$0xf]
    %v84 = vld [vmem:[#allocation2 + $0x34] sm:$0xf]
    %v85 = vld [vmem:[#allocation2 + $0x38] sm:$0xf]
    %v86 = vld [vmem:[#allocation2 + $0x3c] sm:$0xf]
    %v87 = vld [vmem:[%s2] sm:$0x1]
    %v89 = vlaneseq
    %v90 = vshrl.u32 %v89, 7
    %v91 = vsub.s32 0, %v90
    %v92 = vrot.slane %v87, %v91
    %v110 = vunpack.c.l.b16 %v71
    %v111 = vunpack.c.l.b16 %v72
    %v112 = vunpack.c.l.b16 %v73
    %v113 = vunpack.c.l.b16 %v74
    %v114 = vunpack.c.l.b16 %v75
    %v115 = vunpack.c.l.b16 %v76
    %v116 = vunpack.c.l.b16 %v77
    %v117 = vunpack.c.l.b16 %v78
    %v118 = vunpack.c.l.b16 %v79
    %v119 = vunpack.c.l.b16 %v80
    %v120 = vunpack.c.l.b16 %v81
    %v121 = vunpack.c.l.b16 %v82
    %v122 = vunpack.c.l.b16 %v83
    %v123 = vunpack.c.l.b16 %v84
    %v124 = vunpack.c.l.b16 %v85
    %v125 = vunpack.c.l.b16 %v86
    %v126 = vpack.c.b16 %v111, %v110
    %v127 = vpack.c.b16 %v113, %v112
    %v128 = vpack.c.b16 %v115, %v114
    %v129 = vpack.c.b16 %v117, %v116
    %v130 = vpack.c.b16 %v119, %v118
    %v131 = vpack.c.b16 %v121, %v120
    %v132 = vpack.c.b16 %v123, %v122
    %v133 = vpack.c.b16 %v125, %v124
    %142 = vmatprep.subr.bf16.mxu0 0
    %143 = vmatpush1.bf16.msra.mxu0 %v133
    %144 = vmatprep.subr.bf16.mxu0 0
    %145 = vmatpush1.bf16.msra.mxu0 %v132
    %146 = vmatprep.subr.bf16.mxu0 0
    %147 = vmatpush1.bf16.msra.mxu0 %v131
    %148 = vmatprep.subr.bf16.mxu0 0
    %149 = vmatpush1.bf16.msra.mxu0 %v130
    %150 = vmatprep.subr.bf16.mxu0 0
    %151 = vmatpush1.bf16.msra.mxu0 %v129
    %152 = vmatprep.subr.bf16.mxu0 0
    %153 = vmatpush1.bf16.msra.mxu0 %v128
    %154 = vmatprep.subr.bf16.mxu0 0
    %155 = vmatpush1.bf16.msra.mxu0 %v127
    %156 = vmatprep.subr.bf16.mxu0 0
    %157 = vmatpush1.bf16.msra.mxu0 %v126
    %158 = vmatprep.subr.bf16.mxu0 0
    %159 = vmatpush2.bf16.msra.mxu0 0
    %160 = vmatprep.subr.bf16.mxu0 0
    %161 = vmatpush2.bf16.msra.mxu0 0
    %162 = vmatprep.subr.bf16.mxu0 0
    %163 = vmatpush2.bf16.msra.mxu0 0
    %164 = vmatprep.subr.bf16.mxu0 0
    %165 = vmatpush2.bf16.msra.mxu0 0
    %166 = vmatprep.subr.bf16.mxu0 0
    %167 = vmatpush2.bf16.msra.mxu0 0
    %168 = vmatprep.subr.bf16.mxu0 0
    %169 = vmatpush2.bf16.msra.mxu0 0
    %170 = vmatprep.subr.bf16.mxu0 0
    %171 = vmatpush2.bf16.msra.mxu0 0
    %172 = vmatprep.subr.bf16.mxu0 0
    %173 = vmatpush2.bf16.msra.mxu0 0
    %174 = vmatprep.mubr.bf16.mxu0 0
    %175 = vmatmul.mubr.bf16.gmra.mxu0 %v70
    %v176 = vpop.f32.mrf.mxu0
    %v177 = vadd.f32 %v92, %v176
    %v178 = vpop.f32.mrf.mxu0
    %v179 = vpop.f32.mrf.mxu0
    %v180 = vpop.f32.mrf.mxu0
    %181 = vdwg.mxu0
    %v182 = vmax.f32 %v177, 0.0
    %v183 = vpack.c.bf16 %v182, %v182
    %v184 = vld [vmem:[#allocation5] sm:$0xff]
    %v185 = vld [vmem:[#allocation5 + $0x8] sm:$0xff]
    %v186 = vld [vmem:[#allocation5 + $0x10] sm:$0xff]
    %v187 = vld [vmem:[#allocation5 + $0x18] sm:$0xff]
    %v188 = vld [vmem:[#allocation5 + $0x20] sm:$0xff]
    %v189 = vld [vmem:[#allocation5 + $0x28] sm:$0xff]
    %v190 = vld [vmem:[#allocation5 + $0x30] sm:$0xff]
    %v191 = vld [vmem:[#allocation5 + $0x38] sm:$0xff]
    %v192 = vld [vmem:[#allocation5 + $0x40] sm:$0xff]
    %v193 = vld [vmem:[#allocation5 + $0x48] sm:$0xff]
    %v194 = vld [vmem:[#allocation5 + $0x50] sm:$0xff]
    %v195 = vld [vmem:[#allocation5 + $0x58] sm:$0xff]
    %v196 = vld [vmem:[#allocation5 + $0x60] sm:$0xff]
    %v197 = vld [vmem:[#allocation5 + $0x68] sm:$0xff]
    %v198 = vld [vmem:[#allocation5 + $0x70] sm:$0xff]
    %v199 = vld [vmem:[#allocation5 + $0x78] sm:$0xff]
    %v200 = vld [vmem:[%s4] sm:$0x3]
    %v202 = vlaneseq
    %v203 = vshrl.u32 %v202, 7
    %v204 = vsub.s32 0, %v203
    %v205 = vrot.slane %v200, %v204
    %v206 = vlaneseq
    %v207 = vshrl.u32 %v206, 7
    %v208 = vsub.s32 1, %v207
    %v209 = vrot.slane %v200, %v208
    %v228 = vunpack.c.l.b16 %v184
    %v229 = vunpack.c.h.b16 %v184
    %v230 = vunpack.c.l.b16 %v185
    %v231 = vunpack.c.h.b16 %v185
    %v232 = vunpack.c.l.b16 %v186
    %v233 = vunpack.c.h.b16 %v186
    %v234 = vunpack.c.l.b16 %v187
    %v235 = vunpack.c.h.b16 %v187
    %v236 = vunpack.c.l.b16 %v188
    %v237 = vunpack.c.h.b16 %v188
    %v238 = vunpack.c.l.b16 %v189
    %v239 = vunpack.c.h.b16 %v189
    %v240 = vunpack.c.l.b16 %v190
    %v241 = vunpack.c.h.b16 %v190
    %v242 = vunpack.c.l.b16 %v191
    %v243 = vunpack.c.h.b16 %v191
    %v244 = vunpack.c.l.b16 %v192
    %v245 = vunpack.c.h.b16 %v192
    %v246 = vunpack.c.l.b16 %v193
    %v247 = vunpack.c.h.b16 %v193
    %v248 = vunpack.c.l.b16 %v194
    %v249 = vunpack.c.h.b16 %v194
    %v250 = vunpack.c.l.b16 %v195
    %v251 = vunpack.c.h.b16 %v195
    %v252 = vunpack.c.l.b16 %v196
    %v253 = vunpack.c.h.b16 %v196
    %v254 = vunpack.c.l.b16 %v197
    %v255 = vunpack.c.h.b16 %v197
    %v256 = vunpack.c.l.b16 %v198
    %v257 = vunpack.c.h.b16 %v198
    %v258 = vunpack.c.l.b16 %v199
    %v259 = vunpack.c.h.b16 %v199
    %v260 = vpack.c.b16 %v230, %v228
    %v261 = vpack.c.b16 %v231, %v229
    %v262 = vpack.c.b16 %v234, %v232
    %v263 = vpack.c.b16 %v235, %v233
    %v264 = vpack.c.b16 %v238, %v236
    %v265 = vpack.c.b16 %v239, %v237
    %v266 = vpack.c.b16 %v242, %v240
    %v267 = vpack.c.b16 %v243, %v241
    %v268 = vpack.c.b16 %v246, %v244
    %v269 = vpack.c.b16 %v247, %v245
    %v270 = vpack.c.b16 %v250, %v248
    %v271 = vpack.c.b16 %v251, %v249
    %v272 = vpack.c.b16 %v254, %v252
    %v273 = vpack.c.b16 %v255, %v253
    %v274 = vpack.c.b16 %v258, %v256
    %v275 = vpack.c.b16 %v259, %v257
    %292 = vmatprep.subr.bf16.mxu0 %v275
    %293 = vmatpush1.bf16.msra.mxu0 %v274
    %294 = vmatprep.subr.bf16.mxu0 %v273
    %295 = vmatpush1.bf16.msra.mxu0 %v272
    %296 = vmatprep.subr.bf16.mxu0 %v271
    %297 = vmatpush1.bf16.msra.mxu0 %v270
    %298 = vmatprep.subr.bf16.mxu0 %v269
    %299 = vmatpush1.bf16.msra.mxu0 %v268
    %300 = vmatprep.subr.bf16.mxu0 %v267
    %301 = vmatpush1.bf16.msra.mxu0 %v266
    %302 = vmatprep.subr.bf16.mxu0 %v265
    %303 = vmatpush1.bf16.msra.mxu0 %v264
    %304 = vmatprep.subr.bf16.mxu0 %v263
    %305 = vmatpush1.bf16.msra.mxu0 %v262
    %306 = vmatprep.subr.bf16.mxu0 %v261
    %307 = vmatpush1.bf16.msra.mxu0 %v260
    %308 = vmatprep.subr.bf16.mxu0 0
    %309 = vmatpush2.bf16.msra.mxu0 0
    %310 = vmatprep.subr.bf16.mxu0 0
    %311 = vmatpush2.bf16.msra.mxu0 0
    %312 = vmatprep.subr.bf16.mxu0 0
    %313 = vmatpush2.bf16.msra.mxu0 0
    %314 = vmatprep.subr.bf16.mxu0 0
    %315 = vmatpush2.bf16.msra.mxu0 0
    %316 = vmatprep.subr.bf16.mxu0 0
    %317 = vmatpush2.bf16.msra.mxu0 0
    %318 = vmatprep.subr.bf16.mxu0 0
    %319 = vmatpush2.bf16.msra.mxu0 0
    %320 = vmatprep.subr.bf16.mxu0 0
    %321 = vmatpush2.bf16.msra.mxu0 0
    %322 = vmatprep.subr.bf16.mxu0 0
    %323 = vmatpush2.bf16.msra.mxu0 0
    %324 = vmatprep.mubr.bf16.mxu0 0
    %325 = vmatmul.mubr.bf16.gmra.mxu0 %v183
    %v326 = vpop.f32.mrf.mxu0
    %v327 = vadd.f32 %v205, %v326
    %v328 = vpop.f32.mrf.mxu0
    %v329 = vadd.f32 %v209, %v328
    %v330 = vpop.f32.mrf.mxu0
    %v331 = vpop.f32.mrf.mxu0
    %332 = vdwg.mxu0
    %v333 = vmax.f32 %v327, 0.0
    %v334 = vmax.f32 %v329, 0.0
    %v335 = vpack.c.bf16 %v333, %v333
    %v336 = vpack.c.bf16 %v334, %v334
    %v337 = vld [vmem:[#allocation7] sm:$0xf]
    %v338 = vld [vmem:[#allocation7 + $0x4] sm:$0xf]
    %v339 = vld [vmem:[#allocation7 + $0x8] sm:$0xf]
    %v340 = vld [vmem:[#allocation7 + $0xc] sm:$0xf]
    %v341 = vld [vmem:[#allocation7 + $0x10] sm:$0xf]
    %v342 = vld [vmem:[#allocation7 + $0x14] sm:$0xf]
    %v343 = vld [vmem:[#allocation7 + $0x18] sm:$0xf]
    %v344 = vld [vmem:[#allocation7 + $0x1c] sm:$0xf]
    %v345 = vld [vmem:[#allocation7 + $0x20] sm:$0xf]
    %v346 = vld [vmem:[#allocation7 + $0x24] sm:$0xf]
    %v347 = vld [vmem:[#allocation7 + $0x28] sm:$0xf]
    %v348 = vld [vmem:[#allocation7 + $0x2c] sm:$0xf]
    %v349 = vld [vmem:[#allocation7 + $0x30] sm:$0xf]
    %v350 = vld [vmem:[#allocation7 + $0x34] sm:$0xf]
    %v351 = vld [vmem:[#allocation7 + $0x38] sm:$0xf]
    %v352 = vld [vmem:[#allocation7 + $0x3c] sm:$0xf]
    %v353 = vld [vmem:[#allocation7 + $0x40] sm:$0xf]
    %v354 = vld [vmem:[#allocation7 + $0x44] sm:$0xf]
    %v355 = vld [vmem:[#allocation7 + $0x48] sm:$0xf]
    %v356 = vld [vmem:[#allocation7 + $0x4c] sm:$0xf]
    %v357 = vld [vmem:[#allocation7 + $0x50] sm:$0xf]
    %v358 = vld [vmem:[#allocation7 + $0x54] sm:$0xf]
    %v359 = vld [vmem:[#allocation7 + $0x58] sm:$0xf]
    %v360 = vld [vmem:[#allocation7 + $0x5c] sm:$0xf]
    %v361 = vld [vmem:[#allocation7 + $0x60] sm:$0xf]
    %v362 = vld [vmem:[#allocation7 + $0x64] sm:$0xf]
    %v363 = vld [vmem:[#allocation7 + $0x68] sm:$0xf]
    %v364 = vld [vmem:[#allocation7 + $0x6c] sm:$0xf]
    %v365 = vld [vmem:[#allocation7 + $0x70] sm:$0xf]
    %v366 = vld [vmem:[#allocation7 + $0x74] sm:$0xf]
    %v367 = vld [vmem:[#allocation7 + $0x78] sm:$0xf]
    %v368 = vld [vmem:[#allocation7 + $0x7c] sm:$0xf]
    %v369 = vld [vmem:[%s6] sm:$0x1]
    %v371 = vlaneseq
    %v372 = vshrl.u32 %v371, 7
    %v373 = vsub.s32 0, %v372
    %v374 = vrot.slane %v369, %v373
    %v408 = vunpack.c.l.b16 %v337
    %v409 = vunpack.c.l.b16 %v338
    %v410 = vunpack.c.l.b16 %v339
    %v411 = vunpack.c.l.b16 %v340
    %v412 = vunpack.c.l.b16 %v341
    %v413 = vunpack.c.l.b16 %v342
    %v414 = vunpack.c.l.b16 %v343
    %v415 = vunpack.c.l.b16 %v344
    %v416 = vunpack.c.l.b16 %v345
    %v417 = vunpack.c.l.b16 %v346
    %v418 = vunpack.c.l.b16 %v347
    %v419 = vunpack.c.l.b16 %v348
    %v420 = vunpack.c.l.b16 %v349
    %v421 = vunpack.c.l.b16 %v350
    %v422 = vunpack.c.l.b16 %v351
    %v423 = vunpack.c.l.b16 %v352
    %v424 = vunpack.c.l.b16 %v353
    %v425 = vunpack.c.l.b16 %v354
    %v426 = vunpack.c.l.b16 %v355
    %v427 = vunpack.c.l.b16 %v356
    %v428 = vunpack.c.l.b16 %v357
    %v429 = vunpack.c.l.b16 %v358
    %v430 = vunpack.c.l.b16 %v359
    %v431 = vunpack.c.l.b16 %v360
    %v432 = vunpack.c.l.b16 %v361
    %v433 = vunpack.c.l.b16 %v362
    %v434 = vunpack.c.l.b16 %v363
    %v435 = vunpack.c.l.b16 %v364
    %v436 = vunpack.c.l.b16 %v365
    %v437 = vunpack.c.l.b16 %v366
    %v438 = vunpack.c.l.b16 %v367
    %v439 = vunpack.c.l.b16 %v368
    %v440 = vpack.c.b16 %v409, %v408
    %v441 = vpack.c.b16 %v411, %v410
    %v442 = vpack.c.b16 %v413, %v412
    %v443 = vpack.c.b16 %v415, %v414
    %v444 = vpack.c.b16 %v417, %v416
    %v445 = vpack.c.b16 %v419, %v418
    %v446 = vpack.c.b16 %v421, %v420
    %v447 = vpack.c.b16 %v423, %v422
    %v448 = vpack.c.b16 %v425, %v424
    %v449 = vpack.c.b16 %v427, %v426
    %v450 = vpack.c.b16 %v429, %v428
    %v451 = vpack.c.b16 %v431, %v430
    %v452 = vpack.c.b16 %v433, %v432
    %v453 = vpack.c.b16 %v435, %v434
    %v454 = vpack.c.b16 %v437, %v436
    %v455 = vpack.c.b16 %v439, %v438
    %472 = vmatprep.subr.bf16.mxu0 0
    %473 = vmatpush1.bf16.msra.mxu0 %v447
    %474 = vmatprep.subr.bf16.mxu0 0
    %475 = vmatpush1.bf16.msra.mxu0 %v446
    %476 = vmatprep.subr.bf16.mxu0 0
    %477 = vmatpush1.bf16.msra.mxu0 %v445
    %478 = vmatprep.subr.bf16.mxu0 0
    %479 = vmatpush1.bf16.msra.mxu0 %v444
    %480 = vmatprep.subr.bf16.mxu0 0
    %481 = vmatpush1.bf16.msra.mxu0 %v443
    %482 = vmatprep.subr.bf16.mxu0 0
    %483 = vmatpush1.bf16.msra.mxu0 %v442
    %484 = vmatprep.subr.bf16.mxu0 0
    %485 = vmatpush1.bf16.msra.mxu0 %v441
    %486 = vmatprep.subr.bf16.mxu0 0
    %487 = vmatpush1.bf16.msra.mxu0 %v440
    %488 = vmatprep.subr.bf16.mxu0 0
    %489 = vmatpush2.bf16.msra.mxu0 %v455
    %490 = vmatprep.subr.bf16.mxu0 0
    %491 = vmatpush2.bf16.msra.mxu0 %v454
    %492 = vmatprep.subr.bf16.mxu0 0
    %493 = vmatpush2.bf16.msra.mxu0 %v453
    %494 = vmatprep.subr.bf16.mxu0 0
    %495 = vmatpush2.bf16.msra.mxu0 %v452
    %496 = vmatprep.subr.bf16.mxu0 0
    %497 = vmatpush2.bf16.msra.mxu0 %v451
    %498 = vmatprep.subr.bf16.mxu0 0
    %499 = vmatpush2.bf16.msra.mxu0 %v450
    %500 = vmatprep.subr.bf16.mxu0 0
    %501 = vmatpush2.bf16.msra.mxu0 %v449
    %502 = vmatprep.subr.bf16.mxu0 0
    %503 = vmatpush2.bf16.msra.mxu0 %v448
    %504 = vmatprep.mubr.bf16.mxu0 %v336
    %505 = vmatmul.mubr.bf16.gmra.mxu0 %v335
    %v506 = vpop.f32.mrf.mxu0
    %v507 = vadd.f32 %v374, %v506
    %v508 = vpop.f32.mrf.mxu0
    %v509 = vpop.f32.mrf.mxu0
    %v510 = vpop.f32.mrf.mxu0
    %511 = vdwg.mxu0
    %512 = vst [vmem:[#allocation8] sm:$0xff] %v507
    // Predicated region
    $region42: #{_mlp3_forward.1} parent=1 // pred_check
      _
    $region43: #{_mlp3_forward.1} parent=1 // pred_check_branch
      %514 = sbr.rel (0) target = $region45
    $region44: #{_mlp3_forward.1} parent=1 // pred_region
      %s516 = ssub.s32 128, 128
      %517 = vsyncadd [#allocation4], %s516
      %s519 = sshll.u32 [#allocation8], 4
      %s520 = int_to_ptr.vmem [resolvable:$true] %s519
      %522 = dma.vmem_to_hbm [thread:$0]  %s520, 128, %s7, [#allocation4]
    $region45: #{_mlp3_forward.1} parent=1 // pred_fallthru
      _
    // Predicated region
    $region46: #{_mlp3_forward.1} parent=1 // pred_check
      _
    $region47: #{_mlp3_forward.1} parent=1 // pred_check_branch
      %524 = sbr.rel (0) target = $region49
    $region48: #{_mlp3_forward.1} parent=1 // pred_region
      %525 = dma.done [#allocation4], 128
    $region49: #{_mlp3_forward.1} parent=1 // pred_fallthru
      _
    %526 = vsyncpa [#allocation3], 1
    %527 = vsyncpa [#allocation6], 1
    %528 = vsyncpa [#allocation4], 1

</llo_original>
